<compile_context>
chip_gen: v7x
topology: tpu7x:2x2x1
jax: 0.10.0
libtpu: 0.0.40
codegen_flags: <defaults>
</compile_context>

<pallas_src>
import functools

import jax
import jax.numpy as jnp
from jax.experimental import pallas as pl
from jax.experimental.pallas import tpu as pltpu

LEAKY_SLOPE = 0.01  # torch F.leaky_relu default
LN_EPS = 1e-5


def gnff_kernel(x_ref, w1_ref, b1_ref, w2_ref, b2_ref, gamma_ref, beta_ref,
                out_ref):
    x = x_ref[...].astype(jnp.float32)                    # (TM, H)

    # LayerNorm (f32)
    mean = jnp.mean(x, axis=-1, keepdims=True)
    var = jnp.mean((x - mean) ** 2, axis=-1, keepdims=True)
    xn = (x - mean) * jax.lax.rsqrt(var + LN_EPS)
    xn = xn * gamma_ref[...] + beta_ref[...]

    # FF_1 + leaky_relu  (bf16 MXU operands, f32 accumulation)
    h = jnp.dot(xn.astype(jnp.bfloat16), w1_ref[...],
                preferred_element_type=jnp.float32) + b1_ref[...]
    h = jnp.where(h >= 0, h, LEAKY_SLOPE * h)

    # dropout: eval-mode identity

    # FF_2 + leaky_relu
    h = jnp.dot(h.astype(jnp.bfloat16), w2_ref[...],
                preferred_element_type=jnp.float32) + b2_ref[...]
    h = jnp.where(h >= 0, h, LEAKY_SLOPE * h)

    # GateResidue(gate=False): plain residual on the un-normalized input.
    out_ref[...] = (h + x).astype(out_ref.dtype)


@functools.partial(jax.jit, static_argnames=("block_rows",))
def gate_norm_feed_forward(x, w1, b1, w2, b2, gamma, beta, *, block_rows=128):
    """x: (B,N,H)  w1: (H,Hm)  b1: (Hm,)  w2: (Hm,H)  b2: (H,)  gamma/beta: (H,)."""
    B, N, H = x.shape
    Hm = w1.shape[1]
    M = B * N

    x2 = x.reshape(M, H)

    tm = block_rows
    n_tiles = pl.cdiv(M, tm)
    m_pad = n_tiles * tm
    if m_pad != M:
        x2 = jnp.pad(x2, ((0, m_pad - M), (0, 0)))

    # bf16 MXU operands (weights cast once, outside the grid loop).
    w1c = w1.astype(jnp.bfloat16)
    w2c = w2.astype(jnp.bfloat16)
    b1c = b1.reshape(1, Hm).astype(jnp.float32)
    b2c = b2.reshape(1, H).astype(jnp.float32)
    gamma2 = gamma.reshape(1, H).astype(jnp.float32)
    beta2 = beta.reshape(1, H).astype(jnp.float32)

    out = pl.pallas_call(
        gnff_kernel,
        out_shape=jax.ShapeDtypeStruct((m_pad, H), x.dtype),
        grid=(n_tiles,),
        in_specs=[
            pl.BlockSpec((tm, H), lambda i: (i, 0)),     # x rows
            pl.BlockSpec((H, Hm), lambda i: (0, 0)),     # W1  (resident)
            pl.BlockSpec((1, Hm), lambda i: (0, 0)),     # b1  (resident)
            pl.BlockSpec((Hm, H), lambda i: (0, 0)),     # W2  (resident)
            pl.BlockSpec((1, H), lambda i: (0, 0)),      # b2  (resident)
            pl.BlockSpec((1, H), lambda i: (0, 0)),      # gamma
            pl.BlockSpec((1, H), lambda i: (0, 0)),      # beta
        ],
        out_specs=pl.BlockSpec((tm, H), lambda i: (i, 0)),
        compiler_params=pltpu.CompilerParams(
            dimension_semantics=("parallel",),
            vmem_limit_bytes=32 * 1024 * 1024,
        ),
    )(x2, w1c, b1c, w2c, b2c, gamma2, beta2)

    return out[:M].reshape(B, N, H)


def gnff_reference(x, w1, b1, w2, b2, gamma, beta):
    """Pure-JAX reference mirroring the PyTorch forward (eval mode) with the
    same bf16-operand / f32-accumulation convention as the kernel."""
    xf = x.astype(jnp.float32)
    mean = jnp.mean(xf, axis=-1, keepdims=True)
    var = jnp.mean((xf - mean) ** 2, axis=-1, keepdims=True)
    xn = (xf - mean) * jax.lax.rsqrt(var + LN_EPS) * gamma + beta
    h = jnp.dot(xn.astype(jnp.bfloat16), w1.astype(jnp.bfloat16),
                preferred_element_type=jnp.float32) + b1.reshape(1, -1)
    h = jnp.where(h >= 0, h, LEAKY_SLOPE * h)
    h = jnp.dot(h.astype(jnp.bfloat16), w2.astype(jnp.bfloat16),
                preferred_element_type=jnp.float32) + b2.reshape(1, -1)
    h = jnp.where(h >= 0, h, LEAKY_SLOPE * h)
    return h + xf


if __name__ == "__main__":
    # hidden=128 is chosen so the last dim is lane-dense (full 128-lane vregs).
    B, N, H = 4, 64, 128          # batch, sequence, hidden (multi=1 -> Hm=H)

    key = jax.random.PRNGKey(0)
    kx, kw1, kb1, kw2, kb2 = jax.random.split(key, 5)

    x = jax.random.normal(kx, (B, N, H), dtype=jnp.float32)

    # torch.nn.Linear default init: U(-1/sqrt(fan_in), 1/sqrt(fan_in))
    bound = (1.0 / H) ** 0.5
    w1 = jax.random.uniform(kw1, (H, H), minval=-bound, maxval=bound,
                            dtype=jnp.float32)
    b1 = jax.random.uniform(kb1, (H,), minval=-bound, maxval=bound,
                            dtype=jnp.float32)
    w2 = jax.random.uniform(kw2, (H, H), minval=-bound, maxval=bound,
                            dtype=jnp.float32)
    b2 = jax.random.uniform(kb2, (H,), minval=-bound, maxval=bound,
                            dtype=jnp.float32)
    gamma = jnp.ones((H,), dtype=jnp.float32)   # LayerNorm weight
    beta = jnp.zeros((H,), dtype=jnp.float32)   # LayerNorm bias

    out = gate_norm_feed_forward(x, w1, b1, w2, b2, gamma, beta)
    out = jax.block_until_ready(out)

    ref = gnff_reference(x, w1, b1, w2, b2, gamma, beta)
    assert out.shape == ref.shape, "shape mismatch"
    assert jnp.allclose(out, ref, atol=2e-3, rtol=2e-3), "output mismatch"

    print("KERNEL_OK")
</pallas_src>

<mosaic_0001>
module attributes {stable_mosaic.version = 11 : i64} {
  func.func @gnff_kernel(%arg0: i32, %arg1: memref<128x128xf32, #tpu.memory_space<vmem>>, %arg2: memref<128x128xbf16, #tpu.memory_space<vmem>>, %arg3: memref<1x128xf32, #tpu.memory_space<vmem>>, %arg4: memref<128x128xbf16, #tpu.memory_space<vmem>>, %arg5: memref<1x128xf32, #tpu.memory_space<vmem>>, %arg6: memref<1x128xf32, #tpu.memory_space<vmem>>, %arg7: memref<1x128xf32, #tpu.memory_space<vmem>>, %arg8: memref<128x128xf32, #tpu.memory_space<vmem>>) attributes {dimension_semantics = [#tpu.dimension_semantics<parallel>], iteration_bounds = array<i64: 2>, scalar_prefetch = 0 : i64, scratch_operands = 0 : i64, tpu.core_type = #tpu.core_type<tc>, window_params = [{transform_indices = @transform_0, window_bounds = array<i64: 128, 128>}, {pipeline_mode = #tpu.pipeline_mode<synchronous>, transform_indices = @transform_1, window_bounds = array<i64: 128, 128>}, {pipeline_mode = #tpu.pipeline_mode<synchronous>, transform_indices = @transform_2, window_bounds = array<i64: 1, 128>}, {pipeline_mode = #tpu.pipeline_mode<synchronous>, transform_indices = @transform_3, window_bounds = array<i64: 128, 128>}, {pipeline_mode = #tpu.pipeline_mode<synchronous>, transform_indices = @transform_4, window_bounds = array<i64: 1, 128>}, {pipeline_mode = #tpu.pipeline_mode<synchronous>, transform_indices = @transform_5, window_bounds = array<i64: 1, 128>}, {pipeline_mode = #tpu.pipeline_mode<synchronous>, transform_indices = @transform_6, window_bounds = array<i64: 1, 128>}, {transform_indices = @transform_7, window_bounds = array<i64: 128, 128>}]} {
    %c0 = arith.constant 0 : index
    %c0_0 = arith.constant 0 : index
    %0 = vector.load %arg1[%c0, %c0_0] : memref<128x128xf32, #tpu.memory_space<vmem>>, vector<128x128xf32>
    %cst = arith.constant dense<0.000000e+00> : vector<128xf32>
    %1 = vector.multi_reduction <add>, %0, %cst [1] : vector<128x128xf32> to vector<128xf32>
    %2 = vector.shape_cast %1 : vector<128xf32> to vector<128x1xf32>
    %cst_1 = arith.constant 1.280000e+02 : f32
    %3 = vector.broadcast %cst_1 : f32 to vector<128x1xf32>
    %4 = arith.divf %2, %3 : vector<128x1xf32>
    %5 = vector.broadcast %4 : vector<128x1xf32> to vector<128x128xf32>
    %6 = arith.subf %0, %5 : vector<128x128xf32>
    %7 = arith.mulf %6, %6 : vector<128x128xf32>
    %cst_2 = arith.constant dense<0.000000e+00> : vector<128xf32>
    %8 = vector.multi_reduction <add>, %7, %cst_2 [1] : vector<128x128xf32> to vector<128xf32>
    %9 = vector.shape_cast %8 : vector<128xf32> to vector<128x1xf32>
    %cst_3 = arith.constant 1.280000e+02 : f32
    %10 = vector.broadcast %cst_3 : f32 to vector<128x1xf32>
    %11 = arith.divf %9, %10 : vector<128x1xf32>
    %12 = vector.broadcast %4 : vector<128x1xf32> to vector<128x128xf32>
    %13 = arith.subf %0, %12 : vector<128x128xf32>
    %cst_4 = arith.constant 9.99999974E-6 : f32
    %14 = vector.broadcast %cst_4 : f32 to vector<128x1xf32>
    %15 = arith.addf %11, %14 : vector<128x1xf32>
    %16 = math.rsqrt %15 : vector<128x1xf32>
    %17 = vector.broadcast %16 : vector<128x1xf32> to vector<128x128xf32>
    %18 = arith.mulf %13, %17 : vector<128x128xf32>
    %c0_5 = arith.constant 0 : index
    %c0_6 = arith.constant 0 : index
    %19 = vector.load %arg6[%c0_5, %c0_6] : memref<1x128xf32, #tpu.memory_space<vmem>>, vector<1x128xf32>
    %20 = vector.broadcast %19 : vector<1x128xf32> to vector<128x128xf32>
    %21 = arith.mulf %18, %20 : vector<128x128xf32>
    %c0_7 = arith.constant 0 : index
    %c0_8 = arith.constant 0 : index
    %22 = vector.load %arg7[%c0_7, %c0_8] : memref<1x128xf32, #tpu.memory_space<vmem>>, vector<1x128xf32>
    %23 = vector.broadcast %22 : vector<1x128xf32> to vector<128x128xf32>
    %24 = arith.addf %21, %23 : vector<128x128xf32>
    %25 = arith.truncf %24 : vector<128x128xf32> to vector<128x128xbf16>
    %c0_9 = arith.constant 0 : index
    %c0_10 = arith.constant 0 : index
    %26 = vector.load %arg2[%c0_9, %c0_10] : memref<128x128xbf16, #tpu.memory_space<vmem>>, vector<128x128xbf16>
    %cst_11 = arith.constant dense<0.000000e+00> : vector<128x128xf32>
    %27 = tpu.matmul %25, %26, %cst_11 {dimension_numbers = #tpu.dot_dimension_numbers<[1], [0], [0], [1], [0, 0, 1, 1], [], []>} : vector<128x128xbf16>, vector<128x128xbf16>, vector<128x128xf32> -> vector<128x128xf32>
    %c0_12 = arith.constant 0 : index
    %c0_13 = arith.constant 0 : index
    %28 = vector.load %arg3[%c0_12, %c0_13] : memref<1x128xf32, #tpu.memory_space<vmem>>, vector<1x128xf32>
    %29 = vector.broadcast %28 : vector<1x128xf32> to vector<128x128xf32>
    %30 = arith.addf %27, %29 : vector<128x128xf32>
    %cst_14 = arith.constant 0.000000e+00 : f32
    %31 = vector.broadcast %cst_14 : f32 to vector<128x128xf32>
    %32 = arith.cmpf oge, %30, %31 : vector<128x128xf32>
    %cst_15 = arith.constant 0.00999999977 : f32
    %33 = vector.broadcast %cst_15 : f32 to vector<128x128xf32>
    %34 = arith.mulf %33, %30 : vector<128x128xf32>
    %35 = arith.select %32, %30, %34 : vector<128x128xi1>, vector<128x128xf32>
    %36 = arith.truncf %35 : vector<128x128xf32> to vector<128x128xbf16>
    %c0_16 = arith.constant 0 : index
    %c0_17 = arith.constant 0 : index
    %37 = vector.load %arg4[%c0_16, %c0_17] : memref<128x128xbf16, #tpu.memory_space<vmem>>, vector<128x128xbf16>
    %cst_18 = arith.constant dense<0.000000e+00> : vector<128x128xf32>
    %38 = tpu.matmul %36, %37, %cst_18 {dimension_numbers = #tpu.dot_dimension_numbers<[1], [0], [0], [1], [0, 0, 1, 1], [], []>} : vector<128x128xbf16>, vector<128x128xbf16>, vector<128x128xf32> -> vector<128x128xf32>
    %c0_19 = arith.constant 0 : index
    %c0_20 = arith.constant 0 : index
    %39 = vector.load %arg5[%c0_19, %c0_20] : memref<1x128xf32, #tpu.memory_space<vmem>>, vector<1x128xf32>
    %40 = vector.broadcast %39 : vector<1x128xf32> to vector<128x128xf32>
    %41 = arith.addf %38, %40 : vector<128x128xf32>
    %cst_21 = arith.constant 0.000000e+00 : f32
    %42 = vector.broadcast %cst_21 : f32 to vector<128x128xf32>
    %43 = arith.cmpf oge, %41, %42 : vector<128x128xf32>
    %cst_22 = arith.constant 0.00999999977 : f32
    %44 = vector.broadcast %cst_22 : f32 to vector<128x128xf32>
    %45 = arith.mulf %44, %41 : vector<128x128xf32>
    %46 = arith.select %43, %41, %45 : vector<128x128xi1>, vector<128x128xf32>
    %47 = arith.addf %46, %0 : vector<128x128xf32>
    %c0_23 = arith.constant 0 : index
    %c0_24 = arith.constant 0 : index
    %48 = vector.load %arg8[%c0_23, %c0_24] : memref<128x128xf32, #tpu.memory_space<vmem>>, vector<128x128xf32>
    tpu.vector_store %arg8[%c0_23, %c0_24], %47 {strides = array<i32>} : memref<128x128xf32, #tpu.memory_space<vmem>>, vector<128x128xf32>,
    return
  }
  func.func @transform_0(%arg0: i32) -> (i32, i32) {
    %c0_i32 = arith.constant 0 : i32
    %c0_i32_0 = arith.constant 0 : i32
    return %arg0, %c0_i32 : i32, i32
  }
  func.func @transform_1(%arg0: i32) -> (i32, i32) {
    %c0_i32 = arith.constant 0 : i32
    %c0_i32_0 = arith.constant 0 : i32
    %c0_i32_1 = arith.constant 0 : i32
    return %c0_i32, %c0_i32_0 : i32, i32
  }
  func.func @transform_2(%arg0: i32) -> (i32, i32) {
    %c0_i32 = arith.constant 0 : i32
    %c0_i32_0 = arith.constant 0 : i32
    %c0_i32_1 = arith.constant 0 : i32
    return %c0_i32, %c0_i32_0 : i32, i32
  }
  func.func @transform_3(%arg0: i32) -> (i32, i32) {
    %c0_i32 = arith.constant 0 : i32
    %c0_i32_0 = arith.constant 0 : i32
    %c0_i32_1 = arith.constant 0 : i32
    return %c0_i32, %c0_i32_0 : i32, i32
  }
  func.func @transform_4(%arg0: i32) -> (i32, i32) {
    %c0_i32 = arith.constant 0 : i32
    %c0_i32_0 = arith.constant 0 : i32
    %c0_i32_1 = arith.constant 0 : i32
    return %c0_i32, %c0_i32_0 : i32, i32
  }
  func.func @transform_5(%arg0: i32) -> (i32, i32) {
    %c0_i32 = arith.constant 0 : i32
    %c0_i32_0 = arith.constant 0 : i32
    %c0_i32_1 = arith.constant 0 : i32
    return %c0_i32, %c0_i32_0 : i32, i32
  }
  func.func @transform_6(%arg0: i32) -> (i32, i32) {
    %c0_i32 = arith.constant 0 : i32
    %c0_i32_0 = arith.constant 0 : i32
    %c0_i32_1 = arith.constant 0 : i32
    return %c0_i32, %c0_i32_0 : i32, i32
  }
  func.func @transform_7(%arg0: i32) -> (i32, i32) {
    %c0_i32 = arith.constant 0 : i32
    %c0_i32_0 = arith.constant 0 : i32
    return %arg0, %c0_i32 : i32, i32
  }
}

</mosaic_0001>

<llo_original>
// kernel: gate_norm_feed_forward.1
$region0: #{gate_norm_feed_forward.1}
  #allocation0 [shape = 'u32[]', space=smem, size = 0x4, offset = 0x4, fixed_abs, tag = 'smem constant byte address 0x4 - core index']
  #allocation1 [shape = 'u32[144,128]{1,0:T(1,128)}', space=vmem, size = 0x12000, scoped, tag = 'internal scratch']
  %s0 = inlined_call_operand.vmem [shape: f32[256,128], index: 0, kind: input, shape index: {}]
  %s1 = inlined_call_operand.vmem [shape: bf16[128,128], index: 1, kind: input, shape index: {}]
  %s2 = inlined_call_operand.vmem [shape: f32[1,128], index: 2, kind: input, shape index: {}]
  %s3 = inlined_call_operand.vmem [shape: bf16[128,128], index: 3, kind: input, shape index: {}]
  %s4 = inlined_call_operand.vmem [shape: f32[1,128], index: 4, kind: input, shape index: {}]
  %s5 = inlined_call_operand.vmem [shape: f32[1,128], index: 5, kind: input, shape index: {}]
  %s6 = inlined_call_operand.vmem [shape: f32[1,128], index: 6, kind: input, shape index: {}]
  %s7 = inlined_call_operand.hbm [shape: f32[256,128], index: 7, kind: output, shape index: {}]
  %s8 = sld [smem:[#allocation0]]
  $region61: #{gate_norm_feed_forward.1} parent=0
    _
  %s10 = ssub.s32 1, %s8
  %s11 = scalar_select 0, %s10, %s8
  $region1: #{gate_norm_feed_forward.1} parent=0
    #allocation2 [shape = 'u8[131072]{0}', space=vmem, size = 0x20000, scoped, tag = 'output window, operand 0']
    #allocation3 [shape = 's32[2]{0}', space=sflag, size = 0x8, scoped, tag = 'scoped memory for gate_norm_feed_forward.1']
    %12 = vsyncpa [#allocation3], 0
    %s13 = scalar_lea.sflag [#allocation3], 1
    %14 = vsyncpa %s13, 0
    loop: start=0, step=1, limit=4
    $region2: #{gate_norm_feed_forward.1} parent=1 // loop_pre_header
      _
    $region3: #{gate_norm_feed_forward.1} parent=1 // loop_header
      %s16 = sphi 0, %s20
      %p17 = scmp.ge.s32.totalorder %s16, 4
      %s26 = sphi 0, %s28
      %s29 = sphi 0, %s26
      %s30 = sphi 0, %s29
      %s46 = sphi 0, %s30
      %s50 = sphi 0, %s50
      %s52 = sphi 0, %s50
      %s53 = sphi 0, %s52
      %s67 = sphi 0, %s53
      %s71 = sphi 0, %s71
      %s73 = sphi 0, %s71
      %s74 = sphi 0, %s73
      %s88 = sphi 0, %s74
      %s92 = sphi 0, %s92
      %s94 = sphi 0, %s92
      %s95 = sphi 0, %s94
      %s109 = sphi 0, %s95
      %s113 = sphi 0, %s113
      %s115 = sphi 0, %s113
      %s116 = sphi 0, %s115
      %s130 = sphi 0, %s116
      %s134 = sphi 0, %s134
      %s136 = sphi 0, %s134
      %s137 = sphi 0, %s136
      %s151 = sphi 0, %s137
      %s155 = sphi 0, %s155
      %s157 = sphi 0, %s155
      %s158 = sphi 0, %s157
      %s172 = sphi 0, %s158
      %s178 = sphi 0, %s180
      %s181 = sphi 0, %s178
      %s182 = sphi 0, %s181
      %s198 = sphi 0, %s182
    $region4: #{gate_norm_feed_forward.1} parent=1 // loop_header_branch
      %19 = sbr.rel (%p17) target = $region8
    $region5: #{gate_norm_feed_forward.1} parent=1 // loop_body
      %s21 = ssub.s32 %s16, 1
      %s22 = ssub.s32 %s16, 2
      %s23 = sadd.s32 %s16, 1
      %s24 = ssub.s32 %s16, %s23
      %p25 = scmp.eq.s32.totalorder %s24, 0
      %s27 = sadd.s32 %s26, 1
      %s28 = scalar_select %p25, %s26, %s27
      %p31 = pneg %p25
      %p32 = scmp.eq.s32.totalorder %s16, 1
      %p33 = por %p31, %p32
      %p34 = scmp.ne.s32.totalorder %s26, %s29
      %p35 = scmp.eq.s32.totalorder %s16, 0
      %p36 = por %p34, %p35
      %p37 = scmp.ne.s32.totalorder %s26, %s29
      %p38 = scmp.eq.s32.totalorder %s21, 1
      %p39 = por %p37, %p38
      %p40 = scmp.ne.s32.totalorder %s29, %s30
      %p41 = scmp.eq.s32.totalorder %s21, 0
      %p42 = por %p40, %p41
      %p43 = scmp.ne.s32.totalorder %s29, %s30
      %p44 = scmp.eq.s32.totalorder %s22, 1
      %p45 = por %p43, %p44
      %p47 = scmp.ne.s32.totalorder %s30, %s46
      %p48 = scmp.eq.s32.totalorder %s22, 0
      %p49 = por %p47, %p48
      %s51 = sadd.s32 %s50, 1
      %p54 = scmp.eq.s32.totalorder %s16, 1
      %p55 = scmp.ne.s32.totalorder %s50, %s52
      %p56 = scmp.eq.s32.totalorder %s16, 0
      %p57 = por %p55, %p56
      %p58 = scmp.ne.s32.totalorder %s50, %s52
      %p59 = scmp.eq.s32.totalorder %s21, 1
      %p60 = por %p58, %p59
      %p61 = scmp.ne.s32.totalorder %s52, %s53
      %p62 = scmp.eq.s32.totalorder %s21, 0
      %p63 = por %p61, %p62
      %p64 = scmp.ne.s32.totalorder %s52, %s53
      %p65 = scmp.eq.s32.totalorder %s22, 1
      %p66 = por %p64, %p65
      %p68 = scmp.ne.s32.totalorder %s53, %s67
      %p69 = scmp.eq.s32.totalorder %s22, 0
      %p70 = por %p68, %p69
      %s72 = sadd.s32 %s71, 1
      %p75 = scmp.eq.s32.totalorder %s16, 1
      %p76 = scmp.ne.s32.totalorder %s71, %s73
      %p77 = scmp.eq.s32.totalorder %s16, 0
      %p78 = por %p76, %p77
      %p79 = scmp.ne.s32.totalorder %s71, %s73
      %p80 = scmp.eq.s32.totalorder %s21, 1
      %p81 = por %p79, %p80
      %p82 = scmp.ne.s32.totalorder %s73, %s74
      %p83 = scmp.eq.s32.totalorder %s21, 0
      %p84 = por %p82, %p83
      %p85 = scmp.ne.s32.totalorder %s73, %s74
      %p86 = scmp.eq.s32.totalorder %s22, 1
      %p87 = por %p85, %p86
      %p89 = scmp.ne.s32.totalorder %s74, %s88
      %p90 = scmp.eq.s32.totalorder %s22, 0
      %p91 = por %p89, %p90
      %s93 = sadd.s32 %s92, 1
      %p96 = scmp.eq.s32.totalorder %s16, 1
      %p97 = scmp.ne.s32.totalorder %s92, %s94
      %p98 = scmp.eq.s32.totalorder %s16, 0
      %p99 = por %p97, %p98
      %p100 = scmp.ne.s32.totalorder %s92, %s94
      %p101 = scmp.eq.s32.totalorder %s21, 1
      %p102 = por %p100, %p101
      %p103 = scmp.ne.s32.totalorder %s94, %s95
      %p104 = scmp.eq.s32.totalorder %s21, 0
      %p105 = por %p103, %p104
      %p106 = scmp.ne.s32.totalorder %s94, %s95
      %p107 = scmp.eq.s32.totalorder %s22, 1
      %p108 = por %p106, %p107
      %p110 = scmp.ne.s32.totalorder %s95, %s109
      %p111 = scmp.eq.s32.totalorder %s22, 0
      %p112 = por %p110, %p111
      %s114 = sadd.s32 %s113, 1
      %p117 = scmp.eq.s32.totalorder %s16, 1
      %p118 = scmp.ne.s32.totalorder %s113, %s115
      %p119 = scmp.eq.s32.totalorder %s16, 0
      %p120 = por %p118, %p119
      %p121 = scmp.ne.s32.totalorder %s113, %s115
      %p122 = scmp.eq.s32.totalorder %s21, 1
      %p123 = por %p121, %p122
      %p124 = scmp.ne.s32.totalorder %s115, %s116
      %p125 = scmp.eq.s32.totalorder %s21, 0
      %p126 = por %p124, %p125
      %p127 = scmp.ne.s32.totalorder %s115, %s116
      %p128 = scmp.eq.s32.totalorder %s22, 1
      %p129 = por %p127, %p128
      %p131 = scmp.ne.s32.totalorder %s116, %s130
      %p132 = scmp.eq.s32.totalorder %s22, 0
      %p133 = por %p131, %p132
      %s135 = sadd.s32 %s134, 1
      %p138 = scmp.eq.s32.totalorder %s16, 1
      %p139 = scmp.ne.s32.totalorder %s134, %s136
      %p140 = scmp.eq.s32.totalorder %s16, 0
      %p141 = por %p139, %p140
      %p142 = scmp.ne.s32.totalorder %s134, %s136
      %p143 = scmp.eq.s32.totalorder %s21, 1
      %p144 = por %p142, %p143
      %p145 = scmp.ne.s32.totalorder %s136, %s137
      %p146 = scmp.eq.s32.totalorder %s21, 0
      %p147 = por %p145, %p146
      %p148 = scmp.ne.s32.totalorder %s136, %s137
      %p149 = scmp.eq.s32.totalorder %s22, 1
      %p150 = por %p148, %p149
      %p152 = scmp.ne.s32.totalorder %s137, %s151
      %p153 = scmp.eq.s32.totalorder %s22, 0
      %p154 = por %p152, %p153
      %s156 = sadd.s32 %s155, 1
      %p159 = scmp.eq.s32.totalorder %s16, 1
      %p160 = scmp.ne.s32.totalorder %s155, %s157
      %p161 = scmp.eq.s32.totalorder %s16, 0
      %p162 = por %p160, %p161
      %p163 = scmp.ne.s32.totalorder %s155, %s157
      %p164 = scmp.eq.s32.totalorder %s21, 1
      %p165 = por %p163, %p164
      %p166 = scmp.ne.s32.totalorder %s157, %s158
      %p167 = scmp.eq.s32.totalorder %s21, 0
      %p168 = por %p166, %p167
      %p169 = scmp.ne.s32.totalorder %s157, %s158
      %p170 = scmp.eq.s32.totalorder %s22, 1
      %p171 = por %p169, %p170
      %p173 = scmp.ne.s32.totalorder %s158, %s172
      %p174 = scmp.eq.s32.totalorder %s22, 0
      %p175 = por %p173, %p174
      %s176 = ssub.s32 %s16, %s23
      %p177 = scmp.eq.s32.totalorder %s176, 0
      %s179 = sadd.s32 %s178, 1
      %s180 = scalar_select %p177, %s178, %s179
      %p183 = pneg %p177
      %p184 = scmp.eq.s32.totalorder %s16, 1
      %p185 = por %p183, %p184
      %p186 = scmp.ne.s32.totalorder %s178, %s181
      %p187 = scmp.eq.s32.totalorder %s16, 0
      %p188 = por %p186, %p187
      %p189 = scmp.ne.s32.totalorder %s178, %s181
      %p190 = scmp.eq.s32.totalorder %s21, 1
      %p191 = por %p189, %p190
      %p192 = scmp.ne.s32.totalorder %s181, %s182
      %p193 = scmp.eq.s32.totalorder %s21, 0
      %p194 = por %p192, %p193
      %p195 = scmp.ne.s32.totalorder %s181, %s182
      %p196 = scmp.eq.s32.totalorder %s22, 1
      %p197 = por %p195, %p196
      %p199 = scmp.ne.s32.totalorder %s182, %s198
      %p200 = scmp.eq.s32.totalorder %s22, 0
      %p201 = por %p199, %p200
      %p202 = scmp.le.s32.totalorder 1, %s16
      %p203 = scmp.lt.s32.totalorder %s16, 3
      %p204 = pnand %p202, %p203
      %p205 = pneg %p204
      // Predicated region
      $region9: #{gate_norm_feed_forward.1} parent=5 // pred_check
        _
      $region10: #{gate_norm_feed_forward.1} parent=5 // pred_check_branch
        %207 = sbr.rel (%p204) target = $region12
      $region11: #{gate_norm_feed_forward.1} parent=5 // pred_region
        %s208 = ssub.s32 %s16, 1
        // Predicated region
        $region13: #{gate_norm_feed_forward.1} parent=11 // pred_check
          %p209 = pneg %p63
        $region14: #{gate_norm_feed_forward.1} parent=11 // pred_check_branch
          %211 = sbr.rel (%p209) target = $region16
        $region15: #{gate_norm_feed_forward.1} parent=11 // pred_region
          _
        $region16: #{gate_norm_feed_forward.1} parent=11 // pred_fallthru
          _
        // Predicated region
        $region17: #{gate_norm_feed_forward.1} parent=11 // pred_check
          %p212 = pneg %p84
        $region18: #{gate_norm_feed_forward.1} parent=11 // pred_check_branch
          %214 = sbr.rel (%p212) target = $region20
        $region19: #{gate_norm_feed_forward.1} parent=11 // pred_region
          _
        $region20: #{gate_norm_feed_forward.1} parent=11 // pred_fallthru
          _
        // Predicated region
        $region21: #{gate_norm_feed_forward.1} parent=11 // pred_check
          %p215 = pneg %p105
        $region22: #{gate_norm_feed_forward.1} parent=11 // pred_check_branch
          %217 = sbr.rel (%p215) target = $region24
        $region23: #{gate_norm_feed_forward.1} parent=11 // pred_region
          _
        $region24: #{gate_norm_feed_forward.1} parent=11 // pred_fallthru
          _
        // Predicated region
        $region25: #{gate_norm_feed_forward.1} parent=11 // pred_check
          %p218 = pneg %p126
        $region26: #{gate_norm_feed_forward.1} parent=11 // pred_check_branch
          %220 = sbr.rel (%p218) target = $region28
        $region27: #{gate_norm_feed_forward.1} parent=11 // pred_region
          _
        $region28: #{gate_norm_feed_forward.1} parent=11 // pred_fallthru
          _
        // Predicated region
        $region29: #{gate_norm_feed_forward.1} parent=11 // pred_check
          %p221 = pneg %p147
        $region30: #{gate_norm_feed_forward.1} parent=11 // pred_check_branch
          %223 = sbr.rel (%p221) target = $region32
        $region31: #{gate_norm_feed_forward.1} parent=11 // pred_region
          _
        $region32: #{gate_norm_feed_forward.1} parent=11 // pred_fallthru
          _
        // Predicated region
        $region33: #{gate_norm_feed_forward.1} parent=11 // pred_check
          %p224 = pneg %p168
        $region34: #{gate_norm_feed_forward.1} parent=11 // pred_check_branch
          %226 = sbr.rel (%p224) target = $region36
        $region35: #{gate_norm_feed_forward.1} parent=11 // pred_region
          _
        $region36: #{gate_norm_feed_forward.1} parent=11 // pred_fallthru
          _
      $region12: #{gate_norm_feed_forward.1} parent=5 // pred_fallthru
        _
      %p227 = scmp.lt.s32.totalorder %s16, 2
      // Predicated region
      $region37: #{gate_norm_feed_forward.1} parent=5 // pred_check
        %p228 = pneg %p227
      $region38: #{gate_norm_feed_forward.1} parent=5 // pred_check_branch
        %230 = sbr.rel (%p228) target = $region40
      $region39: #{gate_norm_feed_forward.1} parent=5 // pred_region
        // Predicated region
        $region41: #{gate_norm_feed_forward.1} parent=39 // pred_check
          %p231 = pneg %p36
        $region42: #{gate_norm_feed_forward.1} parent=39 // pred_check_branch
          %233 = sbr.rel (%p231) target = $region44
        $region43: #{gate_norm_feed_forward.1} parent=39 // pred_region
          %s234 = smul.u32 16, %s16
          %p235 = scmp.lt.s32.totalorder %s234, 31
          %s236 = scalar_select %p235, %s234, 31
          %s237 = smul.addr %s236, 8
          %s238 = scalar_lea.vmem %s0, %s237
          %s239 = smul.u32 16, %s16
        $region44: #{gate_norm_feed_forward.1} parent=39 // pred_fallthru
          _
      $region40: #{gate_norm_feed_forward.1} parent=5 // pred_fallthru
        _
      %p240 = scmp.le.s32.totalorder 1, %s16
      %p241 = scmp.lt.s32.totalorder %s16, 3
      %p242 = pnand %p240, %p241
      %p243 = pneg %p242
      // Predicated region
      $region45: #{gate_norm_feed_forward.1} parent=5 // pred_check
        _
      $region46: #{gate_norm_feed_forward.1} parent=5 // pred_check_branch
        %245 = sbr.rel (%p242) target = $region48
      $region47: #{gate_norm_feed_forward.1} parent=5 // pred_region
        %s246 = ssub.s32 %s16, 1
        %s247 = smul.u32 16, %s21
        %p248 = scmp.lt.s32.totalorder %s247, 31
        %s249 = scalar_select %p248, %s247, 31
        %s250 = smul.addr %s249, 8
        %s251 = scalar_lea.vmem %s0, %s250
        %p252 = pneg %p42
        %p253 = pneg %p39
        %p254 = pneg %p63
        %p255 = pneg %p60
        %p256 = pneg %p84
        %p257 = pneg %p81
        %p258 = pneg %p105
        %p259 = pneg %p102
        %p260 = pneg %p126
        %p261 = pneg %p123
        %p262 = pneg %p147
        %p263 = pneg %p144
        %p264 = pneg %p168
        %p265 = pneg %p165
        %p266 = pneg %p194
        %p267 = pneg %p191
        %s268 = sand.u32 %s181, 1
        %s269 = scalar_lea.sflag [#allocation3], %s268
        %s270 = sand.u32 %s181, 1
        %s271 = smul.addr %s270, 128
        %s272 = scalar_lea.vmem [#allocation2], %s271
        %s273 = smul.u32 16, %s21
        %p274 = scmp.lt.s32.totalorder %s273, 31
        %s275 = scalar_select %p274, %s273, 31
        %s276 = smul.addr %s275, 8
        %s277 = scalar_lea.vmem %s0, %s276
        %s278 = smul.u32 16, %s21
        %s279 = smul.u32 16, %s21
        %v281 = vld [vmem:[%s277] sm:$0xff]
        %v282 = vld [vmem:[%s277 + $0x8] sm:$0xff]
        %v283 = vld [vmem:[%s277 + $0x10] sm:$0xff]
        %v284 = vld [vmem:[%s277 + $0x18] sm:$0xff]
        %v285 = vld [vmem:[%s277 + $0x20] sm:$0xff]
        %v286 = vld [vmem:[%s277 + $0x28] sm:$0xff]
        %v287 = vld [vmem:[%s277 + $0x30] sm:$0xff]
        %v288 = vld [vmem:[%s277 + $0x38] sm:$0xff]
        %v289 = vld [vmem:[%s277 + $0x40] sm:$0xff]
        %v290 = vld [vmem:[%s277 + $0x48] sm:$0xff]
        %v291 = vld [vmem:[%s277 + $0x50] sm:$0xff]
        %v292 = vld [vmem:[%s277 + $0x58] sm:$0xff]
        %v293 = vld [vmem:[%s277 + $0x60] sm:$0xff]
        %v294 = vld [vmem:[%s277 + $0x68] sm:$0xff]
        %v295 = vld [vmem:[%s277 + $0x70] sm:$0xff]
        %v296 = vld [vmem:[%s277 + $0x78] sm:$0xff]
        %297 = vadd.xlane.f32.xlu0 %v281
        %v298 = vpop.xlane.xlu0 %297
        %299 = vadd.xlane.f32.xlu0 %v282
        %v300 = vpop.xlane.xlu0 %299
        %301 = vadd.xlane.f32.xlu0 %v283
        %v302 = vpop.xlane.xlu0 %301
        %303 = vadd.xlane.f32.xlu0 %v284
        %v304 = vpop.xlane.xlu0 %303
        %305 = vadd.xlane.f32.xlu0 %v285
        %v306 = vpop.xlane.xlu0 %305
        %307 = vadd.xlane.f32.xlu0 %v286
        %v308 = vpop.xlane.xlu0 %307
        %309 = vadd.xlane.f32.xlu0 %v287
        %v310 = vpop.xlane.xlu0 %309
        %311 = vadd.xlane.f32.xlu0 %v288
        %v312 = vpop.xlane.xlu0 %311
        %313 = vadd.xlane.f32.xlu0 %v289
        %v314 = vpop.xlane.xlu0 %313
        %315 = vadd.xlane.f32.xlu0 %v290
        %v316 = vpop.xlane.xlu0 %315
        %317 = vadd.xlane.f32.xlu0 %v291
        %v318 = vpop.xlane.xlu0 %317
        %319 = vadd.xlane.f32.xlu0 %v292
        %v320 = vpop.xlane.xlu0 %319
        %321 = vadd.xlane.f32.xlu0 %v293
        %v322 = vpop.xlane.xlu0 %321
        %323 = vadd.xlane.f32.xlu0 %v294
        %v324 = vpop.xlane.xlu0 %323
        %325 = vadd.xlane.f32.xlu0 %v295
        %v326 = vpop.xlane.xlu0 %325
        %327 = vadd.xlane.f32.xlu0 %v296
        %v328 = vpop.xlane.xlu0 %327
        %v329 = vrcp.pop 128.0
        %v330 = vmul.f32 %v298, %v329
        %v331 = vmul.f32 %v300, %v329
        %v332 = vmul.f32 %v302, %v329
        %v333 = vmul.f32 %v304, %v329
        %v334 = vmul.f32 %v306, %v329
        %v335 = vmul.f32 %v308, %v329
        %v336 = vmul.f32 %v310, %v329
        %v337 = vmul.f32 %v312, %v329
        %v338 = vmul.f32 %v314, %v329
        %v339 = vmul.f32 %v316, %v329
        %v340 = vmul.f32 %v318, %v329
        %v341 = vmul.f32 %v320, %v329
        %v342 = vmul.f32 %v322, %v329
        %v343 = vmul.f32 %v324, %v329
        %v344 = vmul.f32 %v326, %v329
        %v345 = vmul.f32 %v328, %v329
        %v346 = vsub.f32 %v281, %v330
        %v347 = vsub.f32 %v282, %v331
        %v348 = vsub.f32 %v283, %v332
        %v349 = vsub.f32 %v284, %v333
        %v350 = vsub.f32 %v285, %v334
        %v351 = vsub.f32 %v286, %v335
        %v352 = vsub.f32 %v287, %v336
        %v353 = vsub.f32 %v288, %v337
        %v354 = vsub.f32 %v289, %v338
        %v355 = vsub.f32 %v290, %v339
        %v356 = vsub.f32 %v291, %v340
        %v357 = vsub.f32 %v292, %v341
        %v358 = vsub.f32 %v293, %v342
        %v359 = vsub.f32 %v294, %v343
        %v360 = vsub.f32 %v295, %v344
        %v361 = vsub.f32 %v296, %v345
        %v362 = vmul.f32 %v346, %v346
        %v363 = vmul.f32 %v347, %v347
        %v364 = vmul.f32 %v348, %v348
        %v365 = vmul.f32 %v349, %v349
        %v366 = vmul.f32 %v350, %v350
        %v367 = vmul.f32 %v351, %v351
        %v368 = vmul.f32 %v352, %v352
        %v369 = vmul.f32 %v353, %v353
        %v370 = vmul.f32 %v354, %v354
        %v371 = vmul.f32 %v355, %v355
        %v372 = vmul.f32 %v356, %v356
        %v373 = vmul.f32 %v357, %v357
        %v374 = vmul.f32 %v358, %v358
        %v375 = vmul.f32 %v359, %v359
        %v376 = vmul.f32 %v360, %v360
        %v377 = vmul.f32 %v361, %v361
        %378 = vadd.xlane.f32.xlu0 %v362
        %v379 = vpop.xlane.xlu0 %378
        %380 = vadd.xlane.f32.xlu0 %v363
        %v381 = vpop.xlane.xlu0 %380
        %382 = vadd.xlane.f32.xlu0 %v364
        %v383 = vpop.xlane.xlu0 %382
        %384 = vadd.xlane.f32.xlu0 %v365
        %v385 = vpop.xlane.xlu0 %384
        %386 = vadd.xlane.f32.xlu0 %v366
        %v387 = vpop.xlane.xlu0 %386
        %388 = vadd.xlane.f32.xlu0 %v367
        %v389 = vpop.xlane.xlu0 %388
        %390 = vadd.xlane.f32.xlu0 %v368
        %v391 = vpop.xlane.xlu0 %390
        %392 = vadd.xlane.f32.xlu0 %v369
        %v393 = vpop.xlane.xlu0 %392
        %394 = vadd.xlane.f32.xlu0 %v370
        %v395 = vpop.xlane.xlu0 %394
        %396 = vadd.xlane.f32.xlu0 %v371
        %v397 = vpop.xlane.xlu0 %396
        %398 = vadd.xlane.f32.xlu0 %v372
        %v399 = vpop.xlane.xlu0 %398
        %400 = vadd.xlane.f32.xlu0 %v373
        %v401 = vpop.xlane.xlu0 %400
        %402 = vadd.xlane.f32.xlu0 %v374
        %v403 = vpop.xlane.xlu0 %402
        %404 = vadd.xlane.f32.xlu0 %v375
        %v405 = vpop.xlane.xlu0 %404
        %406 = vadd.xlane.f32.xlu0 %v376
        %v407 = vpop.xlane.xlu0 %406
        %408 = vadd.xlane.f32.xlu0 %v377
        %v409 = vpop.xlane.xlu0 %408
        %v410 = vmul.f32 %v379, %v329
        %v411 = vmul.f32 %v381, %v329
        %v412 = vmul.f32 %v383, %v329
        %v413 = vmul.f32 %v385, %v329
        %v414 = vmul.f32 %v387, %v329
        %v415 = vmul.f32 %v389, %v329
        %v416 = vmul.f32 %v391, %v329
        %v417 = vmul.f32 %v393, %v329
        %v418 = vmul.f32 %v395, %v329
        %v419 = vmul.f32 %v397, %v329
        %v420 = vmul.f32 %v399, %v329
        %v421 = vmul.f32 %v401, %v329
        %v422 = vmul.f32 %v403, %v329
        %v423 = vmul.f32 %v405, %v329
        %v424 = vmul.f32 %v407, %v329
        %v425 = vmul.f32 %v409, %v329
        %v426 = vadd.f32 %v410, 1e-05
        %v427 = vadd.f32 %v411, 1e-05
        %v428 = vadd.f32 %v412, 1e-05
        %v429 = vadd.f32 %v413, 1e-05
        %v430 = vadd.f32 %v414, 1e-05
        %v431 = vadd.f32 %v415, 1e-05
        %v432 = vadd.f32 %v416, 1e-05
        %v433 = vadd.f32 %v417, 1e-05
        %v434 = vadd.f32 %v418, 1e-05
        %v435 = vadd.f32 %v419, 1e-05
        %v436 = vadd.f32 %v420, 1e-05
        %v437 = vadd.f32 %v421, 1e-05
        %v438 = vadd.f32 %v422, 1e-05
        %v439 = vadd.f32 %v423, 1e-05
        %v440 = vadd.f32 %v424, 1e-05
        %v441 = vadd.f32 %v425, 1e-05
        %v442 = vrsqrt.pop %v426
        %v443 = vrsqrt.pop %v427
        %v444 = vrsqrt.pop %v428
        %v445 = vrsqrt.pop %v429
        %v446 = vrsqrt.pop %v430
        %v447 = vrsqrt.pop %v431
        %v448 = vrsqrt.pop %v432
        %v449 = vrsqrt.pop %v433
        %v450 = vrsqrt.pop %v434
        %v451 = vrsqrt.pop %v435
        %v452 = vrsqrt.pop %v436
        %v453 = vrsqrt.pop %v437
        %v454 = vrsqrt.pop %v438
        %v455 = vrsqrt.pop %v439
        %v456 = vrsqrt.pop %v440
        %v457 = vrsqrt.pop %v441
        %v458 = vmul.f32 %v346, %v442
        %v459 = vmul.f32 %v347, %v443
        %v460 = vmul.f32 %v348, %v444
        %v461 = vmul.f32 %v349, %v445
        %v462 = vmul.f32 %v350, %v446
        %v463 = vmul.f32 %v351, %v447
        %v464 = vmul.f32 %v352, %v448
        %v465 = vmul.f32 %v353, %v449
        %v466 = vmul.f32 %v354, %v450
        %v467 = vmul.f32 %v355, %v451
        %v468 = vmul.f32 %v356, %v452
        %v469 = vmul.f32 %v357, %v453
        %v470 = vmul.f32 %v358, %v454
        %v471 = vmul.f32 %v359, %v455
        %v472 = vmul.f32 %v360, %v456
        %v473 = vmul.f32 %v361, %v457
        %v474 = vld [vmem:[%s5] sm:$0x1]
        %v476 = vlaneseq
        %v477 = vshrl.u32 %v476, 7
        %v478 = vsub.s32 0, %v477
        %v479 = vrot.slane %v474, %v478
        %v481 = vmul.f32 %v458, %v479
        %v482 = vmul.f32 %v459, %v479
        %v483 = vmul.f32 %v460, %v479
        %v484 = vmul.f32 %v461, %v479
        %v485 = vmul.f32 %v462, %v479
        %v486 = vmul.f32 %v463, %v479
        %v487 = vmul.f32 %v464, %v479
        %v488 = vmul.f32 %v465, %v479
        %v489 = vmul.f32 %v466, %v479
        %v490 = vmul.f32 %v467, %v479
        %v491 = vmul.f32 %v468, %v479
        %v492 = vmul.f32 %v469, %v479
        %v493 = vmul.f32 %v470, %v479
        %v494 = vmul.f32 %v471, %v479
        %v495 = vmul.f32 %v472, %v479
        %v496 = vmul.f32 %v473, %v479
        %v497 = vld [vmem:[%s6] sm:$0x1]
        %v499 = vlaneseq
        %v500 = vshrl.u32 %v499, 7
        %v501 = vsub.s32 0, %v500
        %v502 = vrot.slane %v497, %v501
        %v504 = vadd.f32 %v481, %v502
        %v505 = vadd.f32 %v482, %v502
        %v506 = vadd.f32 %v483, %v502
        %v507 = vadd.f32 %v484, %v502
        %v508 = vadd.f32 %v485, %v502
        %v509 = vadd.f32 %v486, %v502
        %v510 = vadd.f32 %v487, %v502
        %v511 = vadd.f32 %v488, %v502
        %v512 = vadd.f32 %v489, %v502
        %v513 = vadd.f32 %v490, %v502
        %v514 = vadd.f32 %v491, %v502
        %v515 = vadd.f32 %v492, %v502
        %v516 = vadd.f32 %v493, %v502
        %v517 = vadd.f32 %v494, %v502
        %v518 = vadd.f32 %v495, %v502
        %v519 = vadd.f32 %v496, %v502
        %v520 = vpack.c.bf16 %v505, %v504
        %v521 = vpack.c.bf16 %v507, %v506
        %v522 = vpack.c.bf16 %v509, %v508
        %v523 = vpack.c.bf16 %v511, %v510
        %v524 = vpack.c.bf16 %v513, %v512
        %v525 = vpack.c.bf16 %v515, %v514
        %v526 = vpack.c.bf16 %v517, %v516
        %v527 = vpack.c.bf16 %v519, %v518
        %v528 = vld [vmem:[%s1] sm:$0xf]
        %v529 = vld [vmem:[%s1 + $0x4] sm:$0xf]
        %v530 = vld [vmem:[%s1 + $0x8] sm:$0xf]
        %v531 = vld [vmem:[%s1 + $0xc] sm:$0xf]
        %v532 = vld [vmem:[%s1 + $0x10] sm:$0xf]
        %v533 = vld [vmem:[%s1 + $0x14] sm:$0xf]
        %v534 = vld [vmem:[%s1 + $0x18] sm:$0xf]
        %v535 = vld [vmem:[%s1 + $0x1c] sm:$0xf]
        %v536 = vld [vmem:[%s1 + $0x20] sm:$0xf]
        %v537 = vld [vmem:[%s1 + $0x24] sm:$0xf]
        %v538 = vld [vmem:[%s1 + $0x28] sm:$0xf]
        %v539 = vld [vmem:[%s1 + $0x2c] sm:$0xf]
        %v540 = vld [vmem:[%s1 + $0x30] sm:$0xf]
        %v541 = vld [vmem:[%s1 + $0x34] sm:$0xf]
        %v542 = vld [vmem:[%s1 + $0x38] sm:$0xf]
        %v543 = vld [vmem:[%s1 + $0x3c] sm:$0xf]
        %v544 = vld [vmem:[%s2] sm:$0x1]
        %v546 = vlaneseq
        %v547 = vshrl.u32 %v546, 7
        %v548 = vsub.s32 0, %v547
        %v549 = vrot.slane %v544, %v548
        %v567 = vunpack.c.l.b16 %v528
        %v568 = vunpack.c.l.b16 %v529
        %v569 = vunpack.c.l.b16 %v530
        %v570 = vunpack.c.l.b16 %v531
        %v571 = vunpack.c.l.b16 %v532
        %v572 = vunpack.c.l.b16 %v533
        %v573 = vunpack.c.l.b16 %v534
        %v574 = vunpack.c.l.b16 %v535
        %v575 = vunpack.c.l.b16 %v536
        %v576 = vunpack.c.l.b16 %v537
        %v577 = vunpack.c.l.b16 %v538
        %v578 = vunpack.c.l.b16 %v539
        %v579 = vunpack.c.l.b16 %v540
        %v580 = vunpack.c.l.b16 %v541
        %v581 = vunpack.c.l.b16 %v542
        %v582 = vunpack.c.l.b16 %v543
        %v583 = vpack.c.b16 %v568, %v567
        %v584 = vpack.c.b16 %v570, %v569
        %v585 = vpack.c.b16 %v572, %v571
        %v586 = vpack.c.b16 %v574, %v573
        %v587 = vpack.c.b16 %v576, %v575
        %v588 = vpack.c.b16 %v578, %v577
        %v589 = vpack.c.b16 %v580, %v579
        %v590 = vpack.c.b16 %v582, %v581
        %599 = vmatprep.subr.bf16.mxu0 0
        %600 = vmatpush1.bf16.msra.mxu0 %v583
        %601 = vmatprep.subr.bf16.mxu0 0
        %602 = vmatpush1.bf16.msra.mxu0 %v584
        %603 = vmatprep.subr.bf16.mxu0 0
        %604 = vmatpush1.bf16.msra.mxu0 %v585
        %605 = vmatprep.subr.bf16.mxu0 0
        %606 = vmatpush1.bf16.msra.mxu0 %v586
        %607 = vmatprep.subr.bf16.mxu0 0
        %608 = vmatpush1.bf16.msra.mxu0 %v587
        %609 = vmatprep.subr.bf16.mxu0 0
        %610 = vmatpush1.bf16.msra.mxu0 %v588
        %611 = vmatprep.subr.bf16.mxu0 0
        %612 = vmatpush1.bf16.msra.mxu0 %v589
        %613 = vmatprep.subr.bf16.mxu0 0
        %614 = vmatpush1.bf16.msra.mxu0 %v590
        %615 = vmatprep.subr.bf16.mxu0 0
        %616 = vmatpush1.bf16.msra.mxu0 0
        %617 = vmatprep.subr.bf16.mxu0 0
        %618 = vmatpush1.bf16.msra.mxu0 0
        %619 = vmatprep.subr.bf16.mxu0 0
        %620 = vmatpush1.bf16.msra.mxu0 0
        %621 = vmatprep.subr.bf16.mxu0 0
        %622 = vmatpush1.bf16.msra.mxu0 0
        %623 = vmatprep.subr.bf16.mxu0 0
        %624 = vmatpush1.bf16.msra.mxu0 0
        %625 = vmatprep.subr.bf16.mxu0 0
        %626 = vmatpush1.bf16.msra.mxu0 0
        %627 = vmatprep.subr.bf16.mxu0 0
        %628 = vmatpush1.bf16.msra.mxu0 0
        %629 = vmatprep.subr.bf16.mxu0 0
        %630 = vmatpush1.bf16.msra.mxu0 0
        %631 = vmatprep.mubr.bf16.mxu0 0
        %632 = vmatmul.mubr.bf16.gmra.mrb[0].mxu0 %v520
        %v633 = vpop.f32.mrb[0].mxu0
        %v634 = vadd.f32 %v549, %v633
        %v635 = vpop.f32.mrb[0].mxu0
        %v636 = vpop.f32.mrb[0].mxu0
        %v637 = vadd.f32 %v549, %v636
        %v638 = vpop.f32.mrb[0].mxu0
        %639 = vmatprep.mubr.bf16.mxu0 0
        %640 = vmatmul.mubr.bf16.gmra.mrb[0].mxu0 %v521
        %v641 = vpop.f32.mrb[0].mxu0
        %v642 = vadd.f32 %v549, %v641
        %v643 = vpop.f32.mrb[0].mxu0
        %v644 = vpop.f32.mrb[0].mxu0
        %v645 = vadd.f32 %v549, %v644
        %v646 = vpop.f32.mrb[0].mxu0
        %647 = vmatprep.mubr.bf16.mxu0 0
        %648 = vmatmul.mubr.bf16.gmra.mrb[0].mxu0 %v522
        %v649 = vpop.f32.mrb[0].mxu0
        %v650 = vadd.f32 %v549, %v649
        %v651 = vpop.f32.mrb[0].mxu0
        %v652 = vpop.f32.mrb[0].mxu0
        %v653 = vadd.f32 %v549, %v652
        %v654 = vpop.f32.mrb[0].mxu0
        %655 = vmatprep.mubr.bf16.mxu0 0
        %656 = vmatmul.mubr.bf16.gmra.mrb[0].mxu0 %v523
        %v657 = vpop.f32.mrb[0].mxu0
        %v658 = vadd.f32 %v549, %v657
        %v659 = vpop.f32.mrb[0].mxu0
        %v660 = vpop.f32.mrb[0].mxu0
        %v661 = vadd.f32 %v549, %v660
        %v662 = vpop.f32.mrb[0].mxu0
        %663 = vmatprep.mubr.bf16.mxu0 0
        %664 = vmatmul.mubr.bf16.gmra.mrb[0].mxu0 %v524
        %v665 = vpop.f32.mrb[0].mxu0
        %v666 = vadd.f32 %v549, %v665
        %v667 = vpop.f32.mrb[0].mxu0
        %v668 = vpop.f32.mrb[0].mxu0
        %v669 = vadd.f32 %v549, %v668
        %v670 = vpop.f32.mrb[0].mxu0
        %671 = vmatprep.mubr.bf16.mxu0 0
        %672 = vmatmul.mubr.bf16.gmra.mrb[0].mxu0 %v525
        %v673 = vpop.f32.mrb[0].mxu0
        %v674 = vadd.f32 %v549, %v673
        %v675 = vpop.f32.mrb[0].mxu0
        %v676 = vpop.f32.mrb[0].mxu0
        %v677 = vadd.f32 %v549, %v676
        %v678 = vpop.f32.mrb[0].mxu0
        %679 = vmatprep.mubr.bf16.mxu0 0
        %680 = vmatmul.mubr.bf16.gmra.mrb[0].mxu0 %v526
        %v681 = vpop.f32.mrb[0].mxu0
        %v682 = vadd.f32 %v549, %v681
        %v683 = vpop.f32.mrb[0].mxu0
        %v684 = vpop.f32.mrb[0].mxu0
        %v685 = vadd.f32 %v549, %v684
        %v686 = vpop.f32.mrb[0].mxu0
        %687 = vmatprep.mubr.bf16.mxu0 0
        %688 = vmatmul.mubr.bf16.gmra.mrb[0].mxu0 %v527
        %v689 = vpop.f32.mrb[0].mxu0
        %v690 = vadd.f32 %v549, %v689
        %v691 = vpop.f32.mrb[0].mxu0
        %v692 = vpop.f32.mrb[0].mxu0
        %v693 = vadd.f32 %v549, %v692
        %v694 = vpop.f32.mrb[0].mxu0
        %695 = vdwg.mxu0
        %vm696 = vcmp.ge.f32.partialorder %v634, 0.0
        %vm697 = vcmp.ge.f32.partialorder %v637, 0.0
        %vm698 = vcmp.ge.f32.partialorder %v642, 0.0
        %vm699 = vcmp.ge.f32.partialorder %v645, 0.0
        %vm700 = vcmp.ge.f32.partialorder %v650, 0.0
        %vm701 = vcmp.ge.f32.partialorder %v653, 0.0
        %vm702 = vcmp.ge.f32.partialorder %v658, 0.0
        %vm703 = vcmp.ge.f32.partialorder %v661, 0.0
        %vm704 = vcmp.ge.f32.partialorder %v666, 0.0
        %vm705 = vcmp.ge.f32.partialorder %v669, 0.0
        %vm706 = vcmp.ge.f32.partialorder %v674, 0.0
        %vm707 = vcmp.ge.f32.partialorder %v677, 0.0
        %vm708 = vcmp.ge.f32.partialorder %v682, 0.0
        %vm709 = vcmp.ge.f32.partialorder %v685, 0.0
        %vm710 = vcmp.ge.f32.partialorder %v690, 0.0
        %vm711 = vcmp.ge.f32.partialorder %v693, 0.0
        %v712 = vmul.f32 %v634, 0.01
        %v713 = vmul.f32 %v637, 0.01
        %v714 = vmul.f32 %v642, 0.01
        %v715 = vmul.f32 %v645, 0.01
        %v716 = vmul.f32 %v650, 0.01
        %v717 = vmul.f32 %v653, 0.01
        %v718 = vmul.f32 %v658, 0.01
        %v719 = vmul.f32 %v661, 0.01
        %v720 = vmul.f32 %v666, 0.01
        %v721 = vmul.f32 %v669, 0.01
        %v722 = vmul.f32 %v674, 0.01
        %v723 = vmul.f32 %v677, 0.01
        %v724 = vmul.f32 %v682, 0.01
        %v725 = vmul.f32 %v685, 0.01
        %v726 = vmul.f32 %v690, 0.01
        %v727 = vmul.f32 %v693, 0.01
        %v728 = vsel %vm696, %v634, %v712
        %v729 = vsel %vm697, %v637, %v713
        %v730 = vsel %vm698, %v642, %v714
        %v731 = vsel %vm699, %v645, %v715
        %v732 = vsel %vm700, %v650, %v716
        %v733 = vsel %vm701, %v653, %v717
        %v734 = vsel %vm702, %v658, %v718
        %v735 = vsel %vm703, %v661, %v719
        %v736 = vsel %vm704, %v666, %v720
        %v737 = vsel %vm705, %v669, %v721
        %v738 = vsel %vm706, %v674, %v722
        %v739 = vsel %vm707, %v677, %v723
        %v740 = vsel %vm708, %v682, %v724
        %v741 = vsel %vm709, %v685, %v725
        %v742 = vsel %vm710, %v690, %v726
        %v743 = vsel %vm711, %v693, %v727
        %v744 = vpack.c.bf16 %v729, %v728
        %v745 = vpack.c.bf16 %v731, %v730
        %v746 = vpack.c.bf16 %v733, %v732
        %v747 = vpack.c.bf16 %v735, %v734
        %v748 = vpack.c.bf16 %v737, %v736
        %v749 = vpack.c.bf16 %v739, %v738
        %v750 = vpack.c.bf16 %v741, %v740
        %v751 = vpack.c.bf16 %v743, %v742
        %v752 = vld [vmem:[%s3] sm:$0xf]
        %v753 = vld [vmem:[%s3 + $0x4] sm:$0xf]
        %v754 = vld [vmem:[%s3 + $0x8] sm:$0xf]
        %v755 = vld [vmem:[%s3 + $0xc] sm:$0xf]
        %v756 = vld [vmem:[%s3 + $0x10] sm:$0xf]
        %v757 = vld [vmem:[%s3 + $0x14] sm:$0xf]
        %v758 = vld [vmem:[%s3 + $0x18] sm:$0xf]
        %v759 = vld [vmem:[%s3 + $0x1c] sm:$0xf]
        %v760 = vld [vmem:[%s3 + $0x20] sm:$0xf]
        %v761 = vld [vmem:[%s3 + $0x24] sm:$0xf]
        %v762 = vld [vmem:[%s3 + $0x28] sm:$0xf]
        %v763 = vld [vmem:[%s3 + $0x2c] sm:$0xf]
        %v764 = vld [vmem:[%s3 + $0x30] sm:$0xf]
        %v765 = vld [vmem:[%s3 + $0x34] sm:$0xf]
        %v766 = vld [vmem:[%s3 + $0x38] sm:$0xf]
        %v767 = vld [vmem:[%s3 + $0x3c] sm:$0xf]
        %v768 = vld [vmem:[%s4] sm:$0x1]
        %v770 = vlaneseq
        %v771 = vshrl.u32 %v770, 7
        %v772 = vsub.s32 0, %v771
        %v773 = vrot.slane %v768, %v772
        %v791 = vunpack.c.l.b16 %v752
        %v792 = vunpack.c.l.b16 %v753
        %v793 = vunpack.c.l.b16 %v754
        %v794 = vunpack.c.l.b16 %v755
        %v795 = vunpack.c.l.b16 %v756
        %v796 = vunpack.c.l.b16 %v757
        %v797 = vunpack.c.l.b16 %v758
        %v798 = vunpack.c.l.b16 %v759
        %v799 = vunpack.c.l.b16 %v760
        %v800 = vunpack.c.l.b16 %v761
        %v801 = vunpack.c.l.b16 %v762
        %v802 = vunpack.c.l.b16 %v763
        %v803 = vunpack.c.l.b16 %v764
        %v804 = vunpack.c.l.b16 %v765
        %v805 = vunpack.c.l.b16 %v766
        %v806 = vunpack.c.l.b16 %v767
        %v807 = vpack.c.b16 %v792, %v791
        %v808 = vpack.c.b16 %v794, %v793
        %v809 = vpack.c.b16 %v796, %v795
        %v810 = vpack.c.b16 %v798, %v797
        %v811 = vpack.c.b16 %v800, %v799
        %v812 = vpack.c.b16 %v802, %v801
        %v813 = vpack.c.b16 %v804, %v803
        %v814 = vpack.c.b16 %v806, %v805
        %823 = vmatprep.subr.bf16.mxu0 0
        %824 = vmatpush1.bf16.msra.mxu0 %v807
        %825 = vmatprep.subr.bf16.mxu0 0
        %826 = vmatpush1.bf16.msra.mxu0 %v808
        %827 = vmatprep.subr.bf16.mxu0 0
        %828 = vmatpush1.bf16.msra.mxu0 %v809
        %829 = vmatprep.subr.bf16.mxu0 0
        %830 = vmatpush1.bf16.msra.mxu0 %v810
        %831 = vmatprep.subr.bf16.mxu0 0
        %832 = vmatpush1.bf16.msra.mxu0 %v811
        %833 = vmatprep.subr.bf16.mxu0 0
        %834 = vmatpush1.bf16.msra.mxu0 %v812
        %835 = vmatprep.subr.bf16.mxu0 0
        %836 = vmatpush1.bf16.msra.mxu0 %v813
        %837 = vmatprep.subr.bf16.mxu0 0
        %838 = vmatpush1.bf16.msra.mxu0 %v814
        %839 = vmatprep.subr.bf16.mxu0 0
        %840 = vmatpush1.bf16.msra.mxu0 0
        %841 = vmatprep.subr.bf16.mxu0 0
        %842 = vmatpush1.bf16.msra.mxu0 0
        %843 = vmatprep.subr.bf16.mxu0 0
        %844 = vmatpush1.bf16.msra.mxu0 0
        %845 = vmatprep.subr.bf16.mxu0 0
        %846 = vmatpush1.bf16.msra.mxu0 0
        %847 = vmatprep.subr.bf16.mxu0 0
        %848 = vmatpush1.bf16.msra.mxu0 0
        %849 = vmatprep.subr.bf16.mxu0 0
        %850 = vmatpush1.bf16.msra.mxu0 0
        %851 = vmatprep.subr.bf16.mxu0 0
        %852 = vmatpush1.bf16.msra.mxu0 0
        %853 = vmatprep.subr.bf16.mxu0 0
        %854 = vmatpush1.bf16.msra.mxu0 0
        %855 = vmatprep.mubr.bf16.mxu0 0
        %856 = vmatmul.mubr.bf16.gmra.mrb[0].mxu0 %v744
        %v857 = vpop.f32.mrb[0].mxu0
        %v858 = vadd.f32 %v773, %v857
        %v859 = vpop.f32.mrb[0].mxu0
        %v860 = vpop.f32.mrb[0].mxu0
        %v861 = vadd.f32 %v773, %v860
        %v862 = vpop.f32.mrb[0].mxu0
        %863 = vmatprep.mubr.bf16.mxu0 0
        %864 = vmatmul.mubr.bf16.gmra.mrb[0].mxu0 %v745
        %v865 = vpop.f32.mrb[0].mxu0
        %v866 = vadd.f32 %v773, %v865
        %v867 = vpop.f32.mrb[0].mxu0
        %v868 = vpop.f32.mrb[0].mxu0
        %v869 = vadd.f32 %v773, %v868
        %v870 = vpop.f32.mrb[0].mxu0
        %871 = vmatprep.mubr.bf16.mxu0 0
        %872 = vmatmul.mubr.bf16.gmra.mrb[0].mxu0 %v746
        %v873 = vpop.f32.mrb[0].mxu0
        %v874 = vadd.f32 %v773, %v873
        %v875 = vpop.f32.mrb[0].mxu0
        %v876 = vpop.f32.mrb[0].mxu0
        %v877 = vadd.f32 %v773, %v876
        %v878 = vpop.f32.mrb[0].mxu0
        %879 = vmatprep.mubr.bf16.mxu0 0
        %880 = vmatmul.mubr.bf16.gmra.mrb[0].mxu0 %v747
        %v881 = vpop.f32.mrb[0].mxu0
        %v882 = vadd.f32 %v773, %v881
        %v883 = vpop.f32.mrb[0].mxu0
        %v884 = vpop.f32.mrb[0].mxu0
        %v885 = vadd.f32 %v773, %v884
        %v886 = vpop.f32.mrb[0].mxu0
        %887 = vmatprep.mubr.bf16.mxu0 0
        %888 = vmatmul.mubr.bf16.gmra.mrb[0].mxu0 %v748
        %v889 = vpop.f32.mrb[0].mxu0
        %v890 = vadd.f32 %v773, %v889
        %v891 = vpop.f32.mrb[0].mxu0
        %v892 = vpop.f32.mrb[0].mxu0
        %v893 = vadd.f32 %v773, %v892
        %v894 = vpop.f32.mrb[0].mxu0
        %895 = vmatprep.mubr.bf16.mxu0 0
        %896 = vmatmul.mubr.bf16.gmra.mrb[0].mxu0 %v749
        %v897 = vpop.f32.mrb[0].mxu0
        %v898 = vadd.f32 %v773, %v897
        %v899 = vpop.f32.mrb[0].mxu0
        %v900 = vpop.f32.mrb[0].mxu0
        %v901 = vadd.f32 %v773, %v900
        %v902 = vpop.f32.mrb[0].mxu0
        %903 = vmatprep.mubr.bf16.mxu0 0
        %904 = vmatmul.mubr.bf16.gmra.mrb[0].mxu0 %v750
        %v905 = vpop.f32.mrb[0].mxu0
        %v906 = vadd.f32 %v773, %v905
        %v907 = vpop.f32.mrb[0].mxu0
        %v908 = vpop.f32.mrb[0].mxu0
        %v909 = vadd.f32 %v773, %v908
        %v910 = vpop.f32.mrb[0].mxu0
        %911 = vmatprep.mubr.bf16.mxu0 0
        %912 = vmatmul.mubr.bf16.gmra.mrb[0].mxu0 %v751
        %v913 = vpop.f32.mrb[0].mxu0
        %v914 = vadd.f32 %v773, %v913
        %v915 = vpop.f32.mrb[0].mxu0
        %v916 = vpop.f32.mrb[0].mxu0
        %v917 = vadd.f32 %v773, %v916
        %v918 = vpop.f32.mrb[0].mxu0
        %919 = vdwg.mxu0
        %vm920 = vcmp.ge.f32.partialorder %v858, 0.0
        %vm921 = vcmp.ge.f32.partialorder %v861, 0.0
        %vm922 = vcmp.ge.f32.partialorder %v866, 0.0
        %vm923 = vcmp.ge.f32.partialorder %v869, 0.0
        %vm924 = vcmp.ge.f32.partialorder %v874, 0.0
        %vm925 = vcmp.ge.f32.partialorder %v877, 0.0
        %vm926 = vcmp.ge.f32.partialorder %v882, 0.0
        %vm927 = vcmp.ge.f32.partialorder %v885, 0.0
        %vm928 = vcmp.ge.f32.partialorder %v890, 0.0
        %vm929 = vcmp.ge.f32.partialorder %v893, 0.0
        %vm930 = vcmp.ge.f32.partialorder %v898, 0.0
        %vm931 = vcmp.ge.f32.partialorder %v901, 0.0
        %vm932 = vcmp.ge.f32.partialorder %v906, 0.0
        %vm933 = vcmp.ge.f32.partialorder %v909, 0.0
        %vm934 = vcmp.ge.f32.partialorder %v914, 0.0
        %vm935 = vcmp.ge.f32.partialorder %v917, 0.0
        %v936 = vmul.f32 %v858, 0.01
        %v937 = vmul.f32 %v861, 0.01
        %v938 = vmul.f32 %v866, 0.01
        %v939 = vmul.f32 %v869, 0.01
        %v940 = vmul.f32 %v874, 0.01
        %v941 = vmul.f32 %v877, 0.01
        %v942 = vmul.f32 %v882, 0.01
        %v943 = vmul.f32 %v885, 0.01
        %v944 = vmul.f32 %v890, 0.01
        %v945 = vmul.f32 %v893, 0.01
        %v946 = vmul.f32 %v898, 0.01
        %v947 = vmul.f32 %v901, 0.01
        %v948 = vmul.f32 %v906, 0.01
        %v949 = vmul.f32 %v909, 0.01
        %v950 = vmul.f32 %v914, 0.01
        %v951 = vmul.f32 %v917, 0.01
        %v952 = vsel %vm920, %v858, %v936
        %v953 = vsel %vm921, %v861, %v937
        %v954 = vsel %vm922, %v866, %v938
        %v955 = vsel %vm923, %v869, %v939
        %v956 = vsel %vm924, %v874, %v940
        %v957 = vsel %vm925, %v877, %v941
        %v958 = vsel %vm926, %v882, %v942
        %v959 = vsel %vm927, %v885, %v943
        %v960 = vsel %vm928, %v890, %v944
        %v961 = vsel %vm929, %v893, %v945
        %v962 = vsel %vm930, %v898, %v946
        %v963 = vsel %vm931, %v901, %v947
        %v964 = vsel %vm932, %v906, %v948
        %v965 = vsel %vm933, %v909, %v949
        %v966 = vsel %vm934, %v914, %v950
        %v967 = vsel %vm935, %v917, %v951
        %v968 = vadd.f32 %v952, %v281
        %v969 = vadd.f32 %v953, %v282
        %v970 = vadd.f32 %v954, %v283
        %v971 = vadd.f32 %v955, %v284
        %v972 = vadd.f32 %v956, %v285
        %v973 = vadd.f32 %v957, %v286
        %v974 = vadd.f32 %v958, %v287
        %v975 = vadd.f32 %v959, %v288
        %v976 = vadd.f32 %v960, %v289
        %v977 = vadd.f32 %v961, %v290
        %v978 = vadd.f32 %v962, %v291
        %v979 = vadd.f32 %v963, %v292
        %v980 = vadd.f32 %v964, %v293
        %v981 = vadd.f32 %v965, %v294
        %v982 = vadd.f32 %v966, %v295
        %v983 = vadd.f32 %v967, %v296
        %984 = vst [vmem:[%s272] sm:$0xff] %v968
        %985 = vst [vmem:[%s272 + $0x8] sm:$0xff] %v969
        %986 = vst [vmem:[%s272 + $0x10] sm:$0xff] %v970
        %987 = vst [vmem:[%s272 + $0x18] sm:$0xff] %v971
        %988 = vst [vmem:[%s272 + $0x20] sm:$0xff] %v972
        %989 = vst [vmem:[%s272 + $0x28] sm:$0xff] %v973
        %990 = vst [vmem:[%s272 + $0x30] sm:$0xff] %v974
        %991 = vst [vmem:[%s272 + $0x38] sm:$0xff] %v975
        %992 = vst [vmem:[%s272 + $0x40] sm:$0xff] %v976
        %993 = vst [vmem:[%s272 + $0x48] sm:$0xff] %v977
        %994 = vst [vmem:[%s272 + $0x50] sm:$0xff] %v978
        %995 = vst [vmem:[%s272 + $0x58] sm:$0xff] %v979
        %996 = vst [vmem:[%s272 + $0x60] sm:$0xff] %v980
        %997 = vst [vmem:[%s272 + $0x68] sm:$0xff] %v981
        %998 = vst [vmem:[%s272 + $0x70] sm:$0xff] %v982
        %999 = vst [vmem:[%s272 + $0x78] sm:$0xff] %v983
        %s1000 = sand.u32 %s181, 1
        %s1001 = scalar_lea.sflag [#allocation3], %s1000
        %s1002 = sand.u32 %s181, 1
        %s1003 = smul.addr %s1002, 128
        %s1004 = scalar_lea.vmem [#allocation2], %s1003
        // Predicated region
        $region49: #{gate_norm_feed_forward.1} parent=47 // pred_check
          %p1005 = pneg %p191
        $region50: #{gate_norm_feed_forward.1} parent=47 // pred_check_branch
          %1007 = sbr.rel (%p1005) target = $region52
        $region51: #{gate_norm_feed_forward.1} parent=47 // pred_region
          %s1008 = smul.u32 16, %s21
          %s1010 = ssub.s32 2048, 2048
          %1011 = vsyncadd %s1001, %s1010
          %s1012 = smul.addr %s1008, 128
          %s1013 = scalar_lea.hbm %s7, %s1012
          %s1014 = sshll.u32 %s1004, 4
          %s1015 = int_to_ptr.vmem [resolvable:$true] %s1014
          %1020 = dma.vmem_to_hbm [thread:$0]  %s1015, 2048, %s1013, %s1001, 128, 128, 8
        $region52: #{gate_norm_feed_forward.1} parent=47 // pred_fallthru
          _
      $region48: #{gate_norm_feed_forward.1} parent=5 // pred_fallthru
        _
      %p1021 = scmp.le.s32.totalorder 2, %s16
      // Predicated region
      $region53: #{gate_norm_feed_forward.1} parent=5 // pred_check
        %p1022 = pneg %p1021
      $region54: #{gate_norm_feed_forward.1} parent=5 // pred_check_branch
        %1024 = sbr.rel (%p1022) target = $region56
      $region55: #{gate_norm_feed_forward.1} parent=5 // pred_region
        %s1025 = ssub.s32 %s16, 2
        // Predicated region
        $region57: #{gate_norm_feed_forward.1} parent=55 // pred_check
          %p1026 = pneg %p197
        $region58: #{gate_norm_feed_forward.1} parent=55 // pred_check_branch
          %1028 = sbr.rel (%p1026) target = $region60
        $region59: #{gate_norm_feed_forward.1} parent=55 // pred_region
          %s1029 = sand.u32 %s182, 1
          %s1030 = scalar_lea.sflag [#allocation3], %s1029
          %s1031 = sand.u32 %s182, 1
          %s1032 = smul.addr %s1031, 128
          %s1033 = scalar_lea.vmem [#allocation2], %s1032
          %1034 = dma.done %s1030, 2048
        $region60: #{gate_norm_feed_forward.1} parent=55 // pred_fallthru
          _
      $region56: #{gate_norm_feed_forward.1} parent=5 // pred_fallthru
        _
    $region6: #{gate_norm_feed_forward.1} parent=1 // loop_footer
      %s20 = sadd.s32 1, %s16
    $region7: #{gate_norm_feed_forward.1} parent=1 // loop_footer_branch
      %15 = sbr.rel target = $region3
    $region8: #{gate_norm_feed_forward.1} parent=1 // loop_exit
      _
    %1035 = vsyncpa [#allocation3], 1
    %s1036 = scalar_lea.sflag [#allocation3], 1
    %1037 = vsyncpa %s1036, 1

</llo_original>
